<compile_context>
chip_gen: v7x
topology: tpu7x:2x2x1
jax: 0.10.0
libtpu: 0.0.40
codegen_flags: <defaults>
</compile_context>

<pallas_src>
import jax
import jax.numpy as jnp
from jax.experimental import pallas as pl
from jax.experimental.pallas import tpu as pltpu

_LANE = 128
_SUBLANE = 8


def _round_up(x, m):
    return (x + m - 1) // m * m


def _num_tensorcores():
    """1 TC per chip on v5e/v6e, 2 on v7x.  Defaults to 1 if unknown."""
    try:
        kind = jax.devices()[0].device_kind.lower()
    except Exception:
        return 1
    return 2 if ("v7" in kind or "7x" in kind) else 1


def _ddp_mlp_kernel(x_ref, w1_ref, b1_ref, w2_ref, b2_ref, o_ref):
    # x: (TB, D_in) f32, w1: (D_in, Hp) bf16, b1: (1, Hp) f32,
    # w2: (Hp, D_out) bf16, b2: (1, D_out) f32, o: (TB, D_out) f32.
    # bf16 MXU operands, f32 accumulation; bias + ReLU epilogue stays in f32.
    h = jnp.dot(x_ref[...].astype(jnp.bfloat16), w1_ref[...],
                preferred_element_type=jnp.float32)
    h = jnp.maximum(h + b1_ref[...], 0.0)                     # VPU, f32
    y = jnp.dot(h.astype(jnp.bfloat16), w2_ref[...],
                preferred_element_type=jnp.float32)
    o_ref[...] = (y + b2_ref[...]).astype(o_ref.dtype)


def prepare_params(w1, b1, w2, b2):
    """One-time padding / bf16 cast of the module parameters (hoisted out of
    the per-call forward path)."""
    D_in, H = w1.shape
    D_out = w2.shape[1]
    Hp = _round_up(H, _LANE)  # lane-dense hidden dim

    w1p = jnp.zeros((D_in, Hp), jnp.bfloat16).at[:, :H].set(
        w1.astype(jnp.bfloat16))
    b1p = jnp.zeros((1, Hp), jnp.float32).at[0, :H].set(b1.astype(jnp.float32))
    # Only the K (hidden) dim of w2 is padded; output dim stays un-padded so
    # the kernel writes the final (Bp, D_out) result directly.
    w2p = jnp.zeros((Hp, D_out), jnp.bfloat16).at[:H, :].set(
        w2.astype(jnp.bfloat16))
    b2p = b2.astype(jnp.float32).reshape(1, D_out)
    return w1p, b1p, w2p, b2p


def ddp_forward(x, params, *, num_cores=None):
    """Forward of DistributedDataParallel(manager, MLP) — i.e. MLP(x)."""
    w1p, b1p, w2p, b2p = params
    B, D_in = x.shape
    Hp = w1p.shape[1]
    D_out = w2p.shape[1]

    if num_cores is None:
        num_cores = _num_tensorcores()

    # One grid step per TensorCore; TB stays a multiple of 8 sublanes.
    Bp = _round_up(B, _SUBLANE * num_cores)
    TB = Bp // num_cores

    # Only pad the batch if needed (it isn't for B % TB == 0) to keep the
    # per-call path free of extra XLA copy kernels.
    xb = x if Bp == B else jnp.zeros((Bp, D_in), x.dtype).at[:B].set(x)

    out = pl.pallas_call(
        _ddp_mlp_kernel,
        out_shape=jax.ShapeDtypeStruct((Bp, D_out), x.dtype),
        grid=(num_cores,),
        in_specs=[
            pl.BlockSpec((TB, D_in), lambda i: (i, 0)),    # batch-tiled x
            pl.BlockSpec((D_in, Hp), lambda i: (0, 0)),    # VMEM-resident w1
            pl.BlockSpec((1, Hp), lambda i: (0, 0)),       # resident b1
            pl.BlockSpec((Hp, D_out), lambda i: (0, 0)),   # VMEM-resident w2
            pl.BlockSpec((1, D_out), lambda i: (0, 0)),    # resident b2
        ],
        out_specs=pl.BlockSpec((TB, D_out), lambda i: (i, 0)),
        compiler_params=pltpu.CompilerParams(
            dimension_semantics=("parallel",)),
    )(xb, w1p, b1p, w2p, b2p)

    return out if Bp == B else out[:B]


if __name__ == "__main__":
    # MLP 32 -> 64 -> 32; batch large enough to exercise per-core tiling.
    B, D_in, H, D_out = 512, 32, 64, 32

    key = jax.random.PRNGKey(0)
    kx, kw1, kb1, kw2, kb2 = jax.random.split(key, 5)

    x = jax.random.normal(kx, (B, D_in), dtype=jnp.float32)
    w1 = jax.random.normal(kw1, (D_in, H), dtype=jnp.float32) * (1.0 / D_in ** 0.5)
    b1 = jax.random.normal(kb1, (H,), dtype=jnp.float32) * 0.01
    w2 = jax.random.normal(kw2, (H, D_out), dtype=jnp.float32) * (1.0 / H ** 0.5)
    b2 = jax.random.normal(kb2, (D_out,), dtype=jnp.float32) * 0.01

    params = prepare_params(w1, b1, w2, b2)   # one-time prep, out of call path
    out = ddp_forward(x, params)
    out = jax.block_until_ready(out)
    assert out.shape == (B, D_out)

    # Reference with the same bf16-operand / f32-accumulate math as the kernel.
    xb16, w1b16, w2b16 = (a.astype(jnp.bfloat16) for a in (x, w1, w2))
    h_ref = jnp.maximum(
        jnp.dot(xb16, w1b16, preferred_element_type=jnp.float32) + b1, 0.0)
    ref = jnp.dot(h_ref.astype(jnp.bfloat16), w2b16,
                  preferred_element_type=jnp.float32) + b2
    assert jnp.allclose(out, ref, atol=1e-3, rtol=1e-3), "mismatch vs bf16 reference"

    # Loose sanity check against the full-f32 forward of the wrapped module.
    ref_f32 = jnp.maximum(x @ w1 + b1, 0.0) @ w2 + b2
    assert jnp.allclose(out, ref_f32, atol=1e-1, rtol=1e-1), "mismatch vs f32 reference"

    print("KERNEL_OK")
</pallas_src>

<mosaic_0001>
module attributes {stable_mosaic.version = 11 : i64} {
  func.func @_ddp_mlp_kernel(%arg0: i32, %arg1: memref<512x32xf32, #tpu.memory_space<vmem>>, %arg2: memref<32x128xbf16, #tpu.memory_space<vmem>>, %arg3: memref<1x128xf32, #tpu.memory_space<vmem>>, %arg4: memref<128x32xbf16, #tpu.memory_space<vmem>>, %arg5: memref<1x32xf32, #tpu.memory_space<vmem>>, %arg6: memref<512x32xf32, #tpu.memory_space<vmem>>) attributes {dimension_semantics = [#tpu.dimension_semantics<parallel>], iteration_bounds = array<i64: 1>, scalar_prefetch = 0 : i64, scratch_operands = 0 : i64, tpu.core_type = #tpu.core_type<tc>, window_params = [{transform_indices = @transform_0, window_bounds = array<i64: 512, 32>}, {pipeline_mode = #tpu.pipeline_mode<synchronous>, transform_indices = @transform_1, window_bounds = array<i64: 32, 128>}, {pipeline_mode = #tpu.pipeline_mode<synchronous>, transform_indices = @transform_2, window_bounds = array<i64: 1, 128>}, {pipeline_mode = #tpu.pipeline_mode<synchronous>, transform_indices = @transform_3, window_bounds = array<i64: 128, 32>}, {pipeline_mode = #tpu.pipeline_mode<synchronous>, transform_indices = @transform_4, window_bounds = array<i64: 1, 32>}, {transform_indices = @transform_5, window_bounds = array<i64: 512, 32>}]} {
    %c0 = arith.constant 0 : index
    %c0_0 = arith.constant 0 : index
    %0 = vector.load %arg1[%c0, %c0_0] : memref<512x32xf32, #tpu.memory_space<vmem>>, vector<512x32xf32>
    %1 = arith.truncf %0 : vector<512x32xf32> to vector<512x32xbf16>
    %c0_1 = arith.constant 0 : index
    %c0_2 = arith.constant 0 : index
    %2 = vector.load %arg2[%c0_1, %c0_2] : memref<32x128xbf16, #tpu.memory_space<vmem>>, vector<32x128xbf16>
    %cst = arith.constant dense<0.000000e+00> : vector<512x128xf32>
    %3 = tpu.matmul %1, %2, %cst {dimension_numbers = #tpu.dot_dimension_numbers<[1], [0], [0], [1], [0, 0, 1, 1], [], []>} : vector<512x32xbf16>, vector<32x128xbf16>, vector<512x128xf32> -> vector<512x128xf32>
    %c0_3 = arith.constant 0 : index
    %c0_4 = arith.constant 0 : index
    %4 = vector.load %arg3[%c0_3, %c0_4] : memref<1x128xf32, #tpu.memory_space<vmem>>, vector<1x128xf32>
    %5 = vector.broadcast %4 : vector<1x128xf32> to vector<512x128xf32>
    %6 = arith.addf %3, %5 : vector<512x128xf32>
    %cst_5 = arith.constant 0.000000e+00 : f32
    %7 = vector.broadcast %cst_5 : f32 to vector<512x128xf32>
    %8 = arith.maximumf %6, %7 : vector<512x128xf32>
    %9 = arith.truncf %8 : vector<512x128xf32> to vector<512x128xbf16>
    %c0_6 = arith.constant 0 : index
    %c0_7 = arith.constant 0 : index
    %10 = vector.load %arg4[%c0_6, %c0_7] : memref<128x32xbf16, #tpu.memory_space<vmem>>, vector<128x32xbf16>
    %cst_8 = arith.constant dense<0.000000e+00> : vector<512x32xf32>
    %11 = tpu.matmul %9, %10, %cst_8 {dimension_numbers = #tpu.dot_dimension_numbers<[1], [0], [0], [1], [0, 0, 1, 1], [], []>} : vector<512x128xbf16>, vector<128x32xbf16>, vector<512x32xf32> -> vector<512x32xf32>
    %c0_9 = arith.constant 0 : index
    %c0_10 = arith.constant 0 : index
    %12 = vector.load %arg5[%c0_9, %c0_10] : memref<1x32xf32, #tpu.memory_space<vmem>>, vector<1x32xf32>
    %13 = vector.broadcast %12 : vector<1x32xf32> to vector<512x32xf32>
    %14 = arith.addf %11, %13 : vector<512x32xf32>
    %c0_11 = arith.constant 0 : index
    %c0_12 = arith.constant 0 : index
    %15 = vector.load %arg6[%c0_11, %c0_12] : memref<512x32xf32, #tpu.memory_space<vmem>>, vector<512x32xf32>
    tpu.vector_store %arg6[%c0_11, %c0_12], %14 {strides = array<i32>} : memref<512x32xf32, #tpu.memory_space<vmem>>, vector<512x32xf32>,
    return
  }
  func.func @transform_0(%arg0: i32) -> (i32, i32) {
    %c0_i32 = arith.constant 0 : i32
    %c0_i32_0 = arith.constant 0 : i32
    return %arg0, %c0_i32 : i32, i32
  }
  func.func @transform_1(%arg0: i32) -> (i32, i32) {
    %c0_i32 = arith.constant 0 : i32
    %c0_i32_0 = arith.constant 0 : i32
    %c0_i32_1 = arith.constant 0 : i32
    return %c0_i32, %c0_i32_0 : i32, i32
  }
  func.func @transform_2(%arg0: i32) -> (i32, i32) {
    %c0_i32 = arith.constant 0 : i32
    %c0_i32_0 = arith.constant 0 : i32
    %c0_i32_1 = arith.constant 0 : i32
    return %c0_i32, %c0_i32_0 : i32, i32
  }
  func.func @transform_3(%arg0: i32) -> (i32, i32) {
    %c0_i32 = arith.constant 0 : i32
    %c0_i32_0 = arith.constant 0 : i32
    %c0_i32_1 = arith.constant 0 : i32
    return %c0_i32, %c0_i32_0 : i32, i32
  }
  func.func @transform_4(%arg0: i32) -> (i32, i32) {
    %c0_i32 = arith.constant 0 : i32
    %c0_i32_0 = arith.constant 0 : i32
    %c0_i32_1 = arith.constant 0 : i32
    return %c0_i32, %c0_i32_0 : i32, i32
  }
  func.func @transform_5(%arg0: i32) -> (i32, i32) {
    %c0_i32 = arith.constant 0 : i32
    %c0_i32_0 = arith.constant 0 : i32
    return %arg0, %c0_i32 : i32, i32
  }
}

</mosaic_0001>

<llo_original>
// kernel: tpu_custom_call.1
$region0: #{tpu_custom_call.1}
  #allocation0 [shape = 'u32[]', space=smem, size = 0x4, offset = 0x4, fixed_abs, tag = 'smem constant byte address 0x4 - core index']
  #allocation1 [shape = 'u32[144,128]{1,0:T(1,128)}', space=vmem, size = 0x12000, scoped, tag = 'internal scratch']
  %s0 = inlined_call_operand.vmem [shape: f32[512,32], index: 0, kind: input, shape index: {}]
  %s1 = inlined_call_operand.vmem [shape: bf16[32,128], index: 1, kind: input, shape index: {}]
  %s2 = inlined_call_operand.vmem [shape: f32[1,128], index: 2, kind: input, shape index: {}]
  %s3 = inlined_call_operand.vmem [shape: bf16[128,32], index: 3, kind: input, shape index: {}]
  %s4 = inlined_call_operand.vmem [shape: f32[1,32], index: 4, kind: input, shape index: {}]
  %s5 = inlined_call_operand.vmem [shape: f32[512,32], index: 5, kind: output, shape index: {}]
  %s6 = sld [smem:[#allocation0]]
  $region30: #{tpu_custom_call.1} parent=0
    _
  %s8 = ssub.s32 1, %s6
  %s9 = scalar_select 0, %s8, %s6
  // Predicated region
  $region2: #{tpu_custom_call.1} parent=0 // pred_check
    _
  $region3: #{tpu_custom_call.1} parent=0 // pred_check_branch
    %11 = sbr.rel (0) target = $region5
  $region4: #{tpu_custom_call.1} parent=0 // pred_region
    _
  $region5: #{tpu_custom_call.1} parent=0 // pred_fallthru
    _
  // Predicated region
  $region6: #{tpu_custom_call.1} parent=0 // pred_check
    _
  $region7: #{tpu_custom_call.1} parent=0 // pred_check_branch
    %13 = sbr.rel (0) target = $region9
  $region8: #{tpu_custom_call.1} parent=0 // pred_region
    _
  $region9: #{tpu_custom_call.1} parent=0 // pred_fallthru
    _
  // Predicated region
  $region10: #{tpu_custom_call.1} parent=0 // pred_check
    _
  $region11: #{tpu_custom_call.1} parent=0 // pred_check_branch
    %15 = sbr.rel (0) target = $region13
  $region12: #{tpu_custom_call.1} parent=0 // pred_region
    _
  $region13: #{tpu_custom_call.1} parent=0 // pred_fallthru
    _
  // Predicated region
  $region14: #{tpu_custom_call.1} parent=0 // pred_check
    _
  $region15: #{tpu_custom_call.1} parent=0 // pred_check_branch
    %17 = sbr.rel (0) target = $region17
  $region16: #{tpu_custom_call.1} parent=0 // pred_region
    _
  $region17: #{tpu_custom_call.1} parent=0 // pred_fallthru
    _
  // Predicated region
  $region18: #{tpu_custom_call.1} parent=0 // pred_check
    _
  $region19: #{tpu_custom_call.1} parent=0 // pred_check_branch
    %19 = sbr.rel (0) target = $region21
  $region20: #{tpu_custom_call.1} parent=0 // pred_region
    _
  $region21: #{tpu_custom_call.1} parent=0 // pred_fallthru
    _
  %v21 = vld [vmem:[%s0] sm:$0xff]
  %v22 = vld [vmem:[%s0 + $0x8] sm:$0xff]
  %v23 = vld [vmem:[%s0 + $0x10] sm:$0xff]
  %v24 = vld [vmem:[%s0 + $0x18] sm:$0xff]
  %v25 = vld [vmem:[%s0 + $0x20] sm:$0xff]
  %v26 = vld [vmem:[%s0 + $0x28] sm:$0xff]
  %v27 = vld [vmem:[%s0 + $0x30] sm:$0xff]
  %v28 = vld [vmem:[%s0 + $0x38] sm:$0xff]
  %v29 = vld [vmem:[%s0 + $0x40] sm:$0xff]
  %v30 = vld [vmem:[%s0 + $0x48] sm:$0xff]
  %v31 = vld [vmem:[%s0 + $0x50] sm:$0xff]
  %v32 = vld [vmem:[%s0 + $0x58] sm:$0xff]
  %v33 = vld [vmem:[%s0 + $0x60] sm:$0xff]
  %v34 = vld [vmem:[%s0 + $0x68] sm:$0xff]
  %v35 = vld [vmem:[%s0 + $0x70] sm:$0xff]
  %v36 = vld [vmem:[%s0 + $0x78] sm:$0xff]
  %v37 = vld [vmem:[%s0 + $0x80] sm:$0xff]
  %v38 = vld [vmem:[%s0 + $0x88] sm:$0xff]
  %v39 = vld [vmem:[%s0 + $0x90] sm:$0xff]
  %v40 = vld [vmem:[%s0 + $0x98] sm:$0xff]
  %v41 = vld [vmem:[%s0 + $0xa0] sm:$0xff]
  %v42 = vld [vmem:[%s0 + $0xa8] sm:$0xff]
  %v43 = vld [vmem:[%s0 + $0xb0] sm:$0xff]
  %v44 = vld [vmem:[%s0 + $0xb8] sm:$0xff]
  %v45 = vld [vmem:[%s0 + $0xc0] sm:$0xff]
  %v46 = vld [vmem:[%s0 + $0xc8] sm:$0xff]
  %v47 = vld [vmem:[%s0 + $0xd0] sm:$0xff]
  %v48 = vld [vmem:[%s0 + $0xd8] sm:$0xff]
  %v49 = vld [vmem:[%s0 + $0xe0] sm:$0xff]
  %v50 = vld [vmem:[%s0 + $0xe8] sm:$0xff]
  %v51 = vld [vmem:[%s0 + $0xf0] sm:$0xff]
  %v52 = vld [vmem:[%s0 + $0xf8] sm:$0xff]
  %v53 = vld [vmem:[%s0 + $0x100] sm:$0xff]
  %v54 = vld [vmem:[%s0 + $0x108] sm:$0xff]
  %v55 = vld [vmem:[%s0 + $0x110] sm:$0xff]
  %v56 = vld [vmem:[%s0 + $0x118] sm:$0xff]
  %v57 = vld [vmem:[%s0 + $0x120] sm:$0xff]
  %v58 = vld [vmem:[%s0 + $0x128] sm:$0xff]
  %v59 = vld [vmem:[%s0 + $0x130] sm:$0xff]
  %v60 = vld [vmem:[%s0 + $0x138] sm:$0xff]
  %v61 = vld [vmem:[%s0 + $0x140] sm:$0xff]
  %v62 = vld [vmem:[%s0 + $0x148] sm:$0xff]
  %v63 = vld [vmem:[%s0 + $0x150] sm:$0xff]
  %v64 = vld [vmem:[%s0 + $0x158] sm:$0xff]
  %v65 = vld [vmem:[%s0 + $0x160] sm:$0xff]
  %v66 = vld [vmem:[%s0 + $0x168] sm:$0xff]
  %v67 = vld [vmem:[%s0 + $0x170] sm:$0xff]
  %v68 = vld [vmem:[%s0 + $0x178] sm:$0xff]
  %v69 = vld [vmem:[%s0 + $0x180] sm:$0xff]
  %v70 = vld [vmem:[%s0 + $0x188] sm:$0xff]
  %v71 = vld [vmem:[%s0 + $0x190] sm:$0xff]
  %v72 = vld [vmem:[%s0 + $0x198] sm:$0xff]
  %v73 = vld [vmem:[%s0 + $0x1a0] sm:$0xff]
  %v74 = vld [vmem:[%s0 + $0x1a8] sm:$0xff]
  %v75 = vld [vmem:[%s0 + $0x1b0] sm:$0xff]
  %v76 = vld [vmem:[%s0 + $0x1b8] sm:$0xff]
  %v77 = vld [vmem:[%s0 + $0x1c0] sm:$0xff]
  %v78 = vld [vmem:[%s0 + $0x1c8] sm:$0xff]
  %v79 = vld [vmem:[%s0 + $0x1d0] sm:$0xff]
  %v80 = vld [vmem:[%s0 + $0x1d8] sm:$0xff]
  %v81 = vld [vmem:[%s0 + $0x1e0] sm:$0xff]
  %v82 = vld [vmem:[%s0 + $0x1e8] sm:$0xff]
  %v83 = vld [vmem:[%s0 + $0x1f0] sm:$0xff]
  %v84 = vld [vmem:[%s0 + $0x1f8] sm:$0xff]
  %v85 = vpack.c.bf16 %v22, %v21
  %v86 = vpack.c.bf16 %v24, %v23
  %v87 = vpack.c.bf16 %v26, %v25
  %v88 = vpack.c.bf16 %v28, %v27
  %v89 = vpack.c.bf16 %v30, %v29
  %v90 = vpack.c.bf16 %v32, %v31
  %v91 = vpack.c.bf16 %v34, %v33
  %v92 = vpack.c.bf16 %v36, %v35
  %v93 = vpack.c.bf16 %v38, %v37
  %v94 = vpack.c.bf16 %v40, %v39
  %v95 = vpack.c.bf16 %v42, %v41
  %v96 = vpack.c.bf16 %v44, %v43
  %v97 = vpack.c.bf16 %v46, %v45
  %v98 = vpack.c.bf16 %v48, %v47
  %v99 = vpack.c.bf16 %v50, %v49
  %v100 = vpack.c.bf16 %v52, %v51
  %v101 = vpack.c.bf16 %v54, %v53
  %v102 = vpack.c.bf16 %v56, %v55
  %v103 = vpack.c.bf16 %v58, %v57
  %v104 = vpack.c.bf16 %v60, %v59
  %v105 = vpack.c.bf16 %v62, %v61
  %v106 = vpack.c.bf16 %v64, %v63
  %v107 = vpack.c.bf16 %v66, %v65
  %v108 = vpack.c.bf16 %v68, %v67
  %v109 = vpack.c.bf16 %v70, %v69
  %v110 = vpack.c.bf16 %v72, %v71
  %v111 = vpack.c.bf16 %v74, %v73
  %v112 = vpack.c.bf16 %v76, %v75
  %v113 = vpack.c.bf16 %v78, %v77
  %v114 = vpack.c.bf16 %v80, %v79
  %v115 = vpack.c.bf16 %v82, %v81
  %v116 = vpack.c.bf16 %v84, %v83
  %v117 = vld [vmem:[%s1] sm:$0xf]
  %v118 = vld [vmem:[%s1 + $0x4] sm:$0xf]
  %v119 = vld [vmem:[%s1 + $0x8] sm:$0xf]
  %v120 = vld [vmem:[%s1 + $0xc] sm:$0xf]
  %v121 = vld [vmem:[%s2] sm:$0x1]
  %v123 = vlaneseq
  %v124 = vshrl.u32 %v123, 7
  %v125 = vsub.s32 0, %v124
  %v126 = vrot.slane %v121, %v125
  %v132 = vunpack.c.l.b16 %v117
  %v133 = vunpack.c.l.b16 %v118
  %v134 = vunpack.c.l.b16 %v119
  %v135 = vunpack.c.l.b16 %v120
  %v136 = vpack.c.b16 %v133, %v132
  %v137 = vpack.c.b16 %v135, %v134
  %vm140 = vcmask 261120
  %v142 = vsel %vm140, %v85, 0
  %v145 = vsel %vm140, %v86, 0
  %v148 = vsel %vm140, %v87, 0
  %v151 = vsel %vm140, %v88, 0
  %v154 = vsel %vm140, %v89, 0
  %v157 = vsel %vm140, %v90, 0
  %v160 = vsel %vm140, %v91, 0
  %v163 = vsel %vm140, %v92, 0
  %v166 = vsel %vm140, %v93, 0
  %v169 = vsel %vm140, %v94, 0
  %v172 = vsel %vm140, %v95, 0
  %v175 = vsel %vm140, %v96, 0
  %v178 = vsel %vm140, %v97, 0
  %v181 = vsel %vm140, %v98, 0
  %v184 = vsel %vm140, %v99, 0
  %v187 = vsel %vm140, %v100, 0
  %v190 = vsel %vm140, %v101, 0
  %v193 = vsel %vm140, %v102, 0
  %v196 = vsel %vm140, %v103, 0
  %v199 = vsel %vm140, %v104, 0
  %v202 = vsel %vm140, %v105, 0
  %v205 = vsel %vm140, %v106, 0
  %v208 = vsel %vm140, %v107, 0
  %v211 = vsel %vm140, %v108, 0
  %v214 = vsel %vm140, %v109, 0
  %v217 = vsel %vm140, %v110, 0
  %v220 = vsel %vm140, %v111, 0
  %v223 = vsel %vm140, %v112, 0
  %v226 = vsel %vm140, %v113, 0
  %v229 = vsel %vm140, %v114, 0
  %v232 = vsel %vm140, %v115, 0
  %v235 = vsel %vm140, %v116, 0
  %237 = vmatprep.subr.bf16.mxu0 0
  %238 = vmatpush1.bf16.msra.mxu0 %v136
  %239 = vmatprep.subr.bf16.mxu0 0
  %240 = vmatpush1.bf16.msra.mxu0 %v137
  %241 = vmatprep.subr.bf16.mxu0 0
  %242 = vmatpush1.bf16.msra.mxu0 0
  %243 = vmatprep.subr.bf16.mxu0 0
  %244 = vmatpush1.bf16.msra.mxu0 0
  %245 = vmatprep.subr.bf16.mxu0 0
  %246 = vmatpush1.bf16.msra.mxu0 0
  %247 = vmatprep.subr.bf16.mxu0 0
  %248 = vmatpush1.bf16.msra.mxu0 0
  %249 = vmatprep.subr.bf16.mxu0 0
  %250 = vmatpush1.bf16.msra.mxu0 0
  %251 = vmatprep.subr.bf16.mxu0 0
  %252 = vmatpush1.bf16.msra.mxu0 0
  %253 = vmatprep.subr.bf16.mxu0 0
  %254 = vmatpush1.bf16.msra.mxu0 0
  %255 = vmatprep.subr.bf16.mxu0 0
  %256 = vmatpush1.bf16.msra.mxu0 0
  %257 = vmatprep.subr.bf16.mxu0 0
  %258 = vmatpush1.bf16.msra.mxu0 0
  %259 = vmatprep.subr.bf16.mxu0 0
  %260 = vmatpush1.bf16.msra.mxu0 0
  %261 = vmatprep.subr.bf16.mxu0 0
  %262 = vmatpush1.bf16.msra.mxu0 0
  %263 = vmatprep.subr.bf16.mxu0 0
  %264 = vmatpush1.bf16.msra.mxu0 0
  %265 = vmatprep.subr.bf16.mxu0 0
  %266 = vmatpush1.bf16.msra.mxu0 0
  %267 = vmatprep.subr.bf16.mxu0 0
  %268 = vmatpush1.bf16.msra.mxu0 0
  %269 = vmatprep.mubr.bf16.mxu0 0
  %270 = vmatmul.mubr.bf16.gmra.mrb[0].mxu0 %v142
  %v271 = vpop.f32.mrb[0].mxu0
  %v272 = vadd.f32 %v126, %v271
  %v273 = vpop.f32.mrb[0].mxu0
  %v274 = vpop.f32.mrb[0].mxu0
  %v275 = vadd.f32 %v126, %v274
  %v276 = vpop.f32.mrb[0].mxu0
  %277 = vmatprep.mubr.bf16.mxu0 0
  %278 = vmatmul.mubr.bf16.gmra.mrb[0].mxu0 %v145
  %v279 = vpop.f32.mrb[0].mxu0
  %v280 = vadd.f32 %v126, %v279
  %v281 = vpop.f32.mrb[0].mxu0
  %v282 = vpop.f32.mrb[0].mxu0
  %v283 = vadd.f32 %v126, %v282
  %v284 = vpop.f32.mrb[0].mxu0
  %285 = vmatprep.mubr.bf16.mxu0 0
  %286 = vmatmul.mubr.bf16.gmra.mrb[0].mxu0 %v148
  %v287 = vpop.f32.mrb[0].mxu0
  %v288 = vadd.f32 %v126, %v287
  %v289 = vpop.f32.mrb[0].mxu0
  %v290 = vpop.f32.mrb[0].mxu0
  %v291 = vadd.f32 %v126, %v290
  %v292 = vpop.f32.mrb[0].mxu0
  %293 = vmatprep.mubr.bf16.mxu0 0
  %294 = vmatmul.mubr.bf16.gmra.mrb[0].mxu0 %v151
  %v295 = vpop.f32.mrb[0].mxu0
  %v296 = vadd.f32 %v126, %v295
  %v297 = vpop.f32.mrb[0].mxu0
  %v298 = vpop.f32.mrb[0].mxu0
  %v299 = vadd.f32 %v126, %v298
  %v300 = vpop.f32.mrb[0].mxu0
  %301 = vmatprep.mubr.bf16.mxu0 0
  %302 = vmatmul.mubr.bf16.gmra.mrb[0].mxu0 %v154
  %v303 = vpop.f32.mrb[0].mxu0
  %v304 = vadd.f32 %v126, %v303
  %v305 = vpop.f32.mrb[0].mxu0
  %v306 = vpop.f32.mrb[0].mxu0
  %v307 = vadd.f32 %v126, %v306
  %v308 = vpop.f32.mrb[0].mxu0
  %309 = vmatprep.mubr.bf16.mxu0 0
  %310 = vmatmul.mubr.bf16.gmra.mrb[0].mxu0 %v157
  %v311 = vpop.f32.mrb[0].mxu0
  %v312 = vadd.f32 %v126, %v311
  %v313 = vpop.f32.mrb[0].mxu0
  %v314 = vpop.f32.mrb[0].mxu0
  %v315 = vadd.f32 %v126, %v314
  %v316 = vpop.f32.mrb[0].mxu0
  %317 = vmatprep.mubr.bf16.mxu0 0
  %318 = vmatmul.mubr.bf16.gmra.mrb[0].mxu0 %v160
  %v319 = vpop.f32.mrb[0].mxu0
  %v320 = vadd.f32 %v126, %v319
  %v321 = vpop.f32.mrb[0].mxu0
  %v322 = vpop.f32.mrb[0].mxu0
  %v323 = vadd.f32 %v126, %v322
  %v324 = vpop.f32.mrb[0].mxu0
  %325 = vmatprep.mubr.bf16.mxu0 0
  %326 = vmatmul.mubr.bf16.gmra.mrb[0].mxu0 %v163
  %v327 = vpop.f32.mrb[0].mxu0
  %v328 = vadd.f32 %v126, %v327
  %v329 = vpop.f32.mrb[0].mxu0
  %v330 = vpop.f32.mrb[0].mxu0
  %v331 = vadd.f32 %v126, %v330
  %v332 = vpop.f32.mrb[0].mxu0
  %333 = vmatprep.mubr.bf16.mxu0 0
  %334 = vmatmul.mubr.bf16.gmra.mrb[0].mxu0 %v166
  %v335 = vpop.f32.mrb[0].mxu0
  %v336 = vadd.f32 %v126, %v335
  %v337 = vpop.f32.mrb[0].mxu0
  %v338 = vpop.f32.mrb[0].mxu0
  %v339 = vadd.f32 %v126, %v338
  %v340 = vpop.f32.mrb[0].mxu0
  %341 = vmatprep.mubr.bf16.mxu0 0
  %342 = vmatmul.mubr.bf16.gmra.mrb[0].mxu0 %v169
  %v343 = vpop.f32.mrb[0].mxu0
  %v344 = vadd.f32 %v126, %v343
  %v345 = vpop.f32.mrb[0].mxu0
  %v346 = vpop.f32.mrb[0].mxu0
  %v347 = vadd.f32 %v126, %v346
  %v348 = vpop.f32.mrb[0].mxu0
  %349 = vmatprep.mubr.bf16.mxu0 0
  %350 = vmatmul.mubr.bf16.gmra.mrb[0].mxu0 %v172
  %v351 = vpop.f32.mrb[0].mxu0
  %v352 = vadd.f32 %v126, %v351
  %v353 = vpop.f32.mrb[0].mxu0
  %v354 = vpop.f32.mrb[0].mxu0
  %v355 = vadd.f32 %v126, %v354
  %v356 = vpop.f32.mrb[0].mxu0
  %357 = vmatprep.mubr.bf16.mxu0 0
  %358 = vmatmul.mubr.bf16.gmra.mrb[0].mxu0 %v175
  %v359 = vpop.f32.mrb[0].mxu0
  %v360 = vadd.f32 %v126, %v359
  %v361 = vpop.f32.mrb[0].mxu0
  %v362 = vpop.f32.mrb[0].mxu0
  %v363 = vadd.f32 %v126, %v362
  %v364 = vpop.f32.mrb[0].mxu0
  %365 = vmatprep.mubr.bf16.mxu0 0
  %366 = vmatmul.mubr.bf16.gmra.mrb[0].mxu0 %v178
  %v367 = vpop.f32.mrb[0].mxu0
  %v368 = vadd.f32 %v126, %v367
  %v369 = vpop.f32.mrb[0].mxu0
  %v370 = vpop.f32.mrb[0].mxu0
  %v371 = vadd.f32 %v126, %v370
  %v372 = vpop.f32.mrb[0].mxu0
  %373 = vmatprep.mubr.bf16.mxu0 0
  %374 = vmatmul.mubr.bf16.gmra.mrb[0].mxu0 %v181
  %v375 = vpop.f32.mrb[0].mxu0
  %v376 = vadd.f32 %v126, %v375
  %v377 = vpop.f32.mrb[0].mxu0
  %v378 = vpop.f32.mrb[0].mxu0
  %v379 = vadd.f32 %v126, %v378
  %v380 = vpop.f32.mrb[0].mxu0
  %381 = vmatprep.mubr.bf16.mxu0 0
  %382 = vmatmul.mubr.bf16.gmra.mrb[0].mxu0 %v184
  %v383 = vpop.f32.mrb[0].mxu0
  %v384 = vadd.f32 %v126, %v383
  %v385 = vpop.f32.mrb[0].mxu0
  %v386 = vpop.f32.mrb[0].mxu0
  %v387 = vadd.f32 %v126, %v386
  %v388 = vpop.f32.mrb[0].mxu0
  %389 = vmatprep.mubr.bf16.mxu0 0
  %390 = vmatmul.mubr.bf16.gmra.mrb[0].mxu0 %v187
  %v391 = vpop.f32.mrb[0].mxu0
  %v392 = vadd.f32 %v126, %v391
  %v393 = vpop.f32.mrb[0].mxu0
  %v394 = vpop.f32.mrb[0].mxu0
  %v395 = vadd.f32 %v126, %v394
  %v396 = vpop.f32.mrb[0].mxu0
  %397 = vmatprep.mubr.bf16.mxu0 0
  %398 = vmatmul.mubr.bf16.gmra.mrb[0].mxu0 %v190
  %v399 = vpop.f32.mrb[0].mxu0
  %v400 = vadd.f32 %v126, %v399
  %v401 = vpop.f32.mrb[0].mxu0
  %v402 = vpop.f32.mrb[0].mxu0
  %v403 = vadd.f32 %v126, %v402
  %v404 = vpop.f32.mrb[0].mxu0
  %405 = vmatprep.mubr.bf16.mxu0 0
  %406 = vmatmul.mubr.bf16.gmra.mrb[0].mxu0 %v193
  %v407 = vpop.f32.mrb[0].mxu0
  %v408 = vadd.f32 %v126, %v407
  %v409 = vpop.f32.mrb[0].mxu0
  %v410 = vpop.f32.mrb[0].mxu0
  %v411 = vadd.f32 %v126, %v410
  %v412 = vpop.f32.mrb[0].mxu0
  %413 = vmatprep.mubr.bf16.mxu0 0
  %414 = vmatmul.mubr.bf16.gmra.mrb[0].mxu0 %v196
  %v415 = vpop.f32.mrb[0].mxu0
  %v416 = vadd.f32 %v126, %v415
  %v417 = vpop.f32.mrb[0].mxu0
  %v418 = vpop.f32.mrb[0].mxu0
  %v419 = vadd.f32 %v126, %v418
  %v420 = vpop.f32.mrb[0].mxu0
  %421 = vmatprep.mubr.bf16.mxu0 0
  %422 = vmatmul.mubr.bf16.gmra.mrb[0].mxu0 %v199
  %v423 = vpop.f32.mrb[0].mxu0
  %v424 = vadd.f32 %v126, %v423
  %v425 = vpop.f32.mrb[0].mxu0
  %v426 = vpop.f32.mrb[0].mxu0
  %v427 = vadd.f32 %v126, %v426
  %v428 = vpop.f32.mrb[0].mxu0
  %429 = vmatprep.mubr.bf16.mxu0 0
  %430 = vmatmul.mubr.bf16.gmra.mrb[0].mxu0 %v202
  %v431 = vpop.f32.mrb[0].mxu0
  %v432 = vadd.f32 %v126, %v431
  %v433 = vpop.f32.mrb[0].mxu0
  %v434 = vpop.f32.mrb[0].mxu0
  %v435 = vadd.f32 %v126, %v434
  %v436 = vpop.f32.mrb[0].mxu0
  %437 = vmatprep.mubr.bf16.mxu0 0
  %438 = vmatmul.mubr.bf16.gmra.mrb[0].mxu0 %v205
  %v439 = vpop.f32.mrb[0].mxu0
  %v440 = vadd.f32 %v126, %v439
  %v441 = vpop.f32.mrb[0].mxu0
  %v442 = vpop.f32.mrb[0].mxu0
  %v443 = vadd.f32 %v126, %v442
  %v444 = vpop.f32.mrb[0].mxu0
  %445 = vmatprep.mubr.bf16.mxu0 0
  %446 = vmatmul.mubr.bf16.gmra.mrb[0].mxu0 %v208
  %v447 = vpop.f32.mrb[0].mxu0
  %v448 = vadd.f32 %v126, %v447
  %v449 = vpop.f32.mrb[0].mxu0
  %v450 = vpop.f32.mrb[0].mxu0
  %v451 = vadd.f32 %v126, %v450
  %v452 = vpop.f32.mrb[0].mxu0
  %453 = vmatprep.mubr.bf16.mxu0 0
  %454 = vmatmul.mubr.bf16.gmra.mrb[0].mxu0 %v211
  %v455 = vpop.f32.mrb[0].mxu0
  %v456 = vadd.f32 %v126, %v455
  %v457 = vpop.f32.mrb[0].mxu0
  %v458 = vpop.f32.mrb[0].mxu0
  %v459 = vadd.f32 %v126, %v458
  %v460 = vpop.f32.mrb[0].mxu0
  %461 = vmatprep.mubr.bf16.mxu0 0
  %462 = vmatmul.mubr.bf16.gmra.mrb[0].mxu0 %v214
  %v463 = vpop.f32.mrb[0].mxu0
  %v464 = vadd.f32 %v126, %v463
  %v465 = vpop.f32.mrb[0].mxu0
  %v466 = vpop.f32.mrb[0].mxu0
  %v467 = vadd.f32 %v126, %v466
  %v468 = vpop.f32.mrb[0].mxu0
  %469 = vmatprep.mubr.bf16.mxu0 0
  %470 = vmatmul.mubr.bf16.gmra.mrb[0].mxu0 %v217
  %v471 = vpop.f32.mrb[0].mxu0
  %v472 = vadd.f32 %v126, %v471
  %v473 = vpop.f32.mrb[0].mxu0
  %v474 = vpop.f32.mrb[0].mxu0
  %v475 = vadd.f32 %v126, %v474
  %v476 = vpop.f32.mrb[0].mxu0
  %477 = vmatprep.mubr.bf16.mxu0 0
  %478 = vmatmul.mubr.bf16.gmra.mrb[0].mxu0 %v220
  %v479 = vpop.f32.mrb[0].mxu0
  %v480 = vadd.f32 %v126, %v479
  %v481 = vpop.f32.mrb[0].mxu0
  %v482 = vpop.f32.mrb[0].mxu0
  %v483 = vadd.f32 %v126, %v482
  %v484 = vpop.f32.mrb[0].mxu0
  %485 = vmatprep.mubr.bf16.mxu0 0
  %486 = vmatmul.mubr.bf16.gmra.mrb[0].mxu0 %v223
  %v487 = vpop.f32.mrb[0].mxu0
  %v488 = vadd.f32 %v126, %v487
  %v489 = vpop.f32.mrb[0].mxu0
  %v490 = vpop.f32.mrb[0].mxu0
  %v491 = vadd.f32 %v126, %v490
  %v492 = vpop.f32.mrb[0].mxu0
  %493 = vmatprep.mubr.bf16.mxu0 0
  %494 = vmatmul.mubr.bf16.gmra.mrb[0].mxu0 %v226
  %v495 = vpop.f32.mrb[0].mxu0
  %v496 = vadd.f32 %v126, %v495
  %v497 = vpop.f32.mrb[0].mxu0
  %v498 = vpop.f32.mrb[0].mxu0
  %v499 = vadd.f32 %v126, %v498
  %v500 = vpop.f32.mrb[0].mxu0
  %501 = vmatprep.mubr.bf16.mxu0 0
  %502 = vmatmul.mubr.bf16.gmra.mrb[0].mxu0 %v229
  %v503 = vpop.f32.mrb[0].mxu0
  %v504 = vadd.f32 %v126, %v503
  %v505 = vpop.f32.mrb[0].mxu0
  %v506 = vpop.f32.mrb[0].mxu0
  %v507 = vadd.f32 %v126, %v506
  %v508 = vpop.f32.mrb[0].mxu0
  %509 = vmatprep.mubr.bf16.mxu0 0
  %510 = vmatmul.mubr.bf16.gmra.mrb[0].mxu0 %v232
  %v511 = vpop.f32.mrb[0].mxu0
  %v512 = vadd.f32 %v126, %v511
  %v513 = vpop.f32.mrb[0].mxu0
  %v514 = vpop.f32.mrb[0].mxu0
  %v515 = vadd.f32 %v126, %v514
  %v516 = vpop.f32.mrb[0].mxu0
  %517 = vmatprep.mubr.bf16.mxu0 0
  %518 = vmatmul.mubr.bf16.gmra.mrb[0].mxu0 %v235
  %v519 = vpop.f32.mrb[0].mxu0
  %v520 = vadd.f32 %v126, %v519
  %v521 = vpop.f32.mrb[0].mxu0
  %v522 = vpop.f32.mrb[0].mxu0
  %v523 = vadd.f32 %v126, %v522
  %v524 = vpop.f32.mrb[0].mxu0
  %525 = vdwg.mxu0
  %v526 = vmax.f32 %v272, 0.0
  %v527 = vmax.f32 %v275, 0.0
  %v528 = vmax.f32 %v280, 0.0
  %v529 = vmax.f32 %v283, 0.0
  %v530 = vmax.f32 %v288, 0.0
  %v531 = vmax.f32 %v291, 0.0
  %v532 = vmax.f32 %v296, 0.0
  %v533 = vmax.f32 %v299, 0.0
  %v534 = vmax.f32 %v304, 0.0
  %v535 = vmax.f32 %v307, 0.0
  %v536 = vmax.f32 %v312, 0.0
  %v537 = vmax.f32 %v315, 0.0
  %v538 = vmax.f32 %v320, 0.0
  %v539 = vmax.f32 %v323, 0.0
  %v540 = vmax.f32 %v328, 0.0
  %v541 = vmax.f32 %v331, 0.0
  %v542 = vmax.f32 %v336, 0.0
  %v543 = vmax.f32 %v339, 0.0
  %v544 = vmax.f32 %v344, 0.0
  %v545 = vmax.f32 %v347, 0.0
  %v546 = vmax.f32 %v352, 0.0
  %v547 = vmax.f32 %v355, 0.0
  %v548 = vmax.f32 %v360, 0.0
  %v549 = vmax.f32 %v363, 0.0
  %v550 = vmax.f32 %v368, 0.0
  %v551 = vmax.f32 %v371, 0.0
  %v552 = vmax.f32 %v376, 0.0
  %v553 = vmax.f32 %v379, 0.0
  %v554 = vmax.f32 %v384, 0.0
  %v555 = vmax.f32 %v387, 0.0
  %v556 = vmax.f32 %v392, 0.0
  %v557 = vmax.f32 %v395, 0.0
  %v558 = vmax.f32 %v400, 0.0
  %v559 = vmax.f32 %v403, 0.0
  %v560 = vmax.f32 %v408, 0.0
  %v561 = vmax.f32 %v411, 0.0
  %v562 = vmax.f32 %v416, 0.0
  %v563 = vmax.f32 %v419, 0.0
  %v564 = vmax.f32 %v424, 0.0
  %v565 = vmax.f32 %v427, 0.0
  %v566 = vmax.f32 %v432, 0.0
  %v567 = vmax.f32 %v435, 0.0
  %v568 = vmax.f32 %v440, 0.0
  %v569 = vmax.f32 %v443, 0.0
  %v570 = vmax.f32 %v448, 0.0
  %v571 = vmax.f32 %v451, 0.0
  %v572 = vmax.f32 %v456, 0.0
  %v573 = vmax.f32 %v459, 0.0
  %v574 = vmax.f32 %v464, 0.0
  %v575 = vmax.f32 %v467, 0.0
  %v576 = vmax.f32 %v472, 0.0
  %v577 = vmax.f32 %v475, 0.0
  %v578 = vmax.f32 %v480, 0.0
  %v579 = vmax.f32 %v483, 0.0
  %v580 = vmax.f32 %v488, 0.0
  %v581 = vmax.f32 %v491, 0.0
  %v582 = vmax.f32 %v496, 0.0
  %v583 = vmax.f32 %v499, 0.0
  %v584 = vmax.f32 %v504, 0.0
  %v585 = vmax.f32 %v507, 0.0
  %v586 = vmax.f32 %v512, 0.0
  %v587 = vmax.f32 %v515, 0.0
  %v588 = vmax.f32 %v520, 0.0
  %v589 = vmax.f32 %v523, 0.0
  %v590 = vpack.c.bf16 %v527, %v526
  %v591 = vpack.c.bf16 %v529, %v528
  %v592 = vpack.c.bf16 %v531, %v530
  %v593 = vpack.c.bf16 %v533, %v532
  %v594 = vpack.c.bf16 %v535, %v534
  %v595 = vpack.c.bf16 %v537, %v536
  %v596 = vpack.c.bf16 %v539, %v538
  %v597 = vpack.c.bf16 %v541, %v540
  %v598 = vpack.c.bf16 %v543, %v542
  %v599 = vpack.c.bf16 %v545, %v544
  %v600 = vpack.c.bf16 %v547, %v546
  %v601 = vpack.c.bf16 %v549, %v548
  %v602 = vpack.c.bf16 %v551, %v550
  %v603 = vpack.c.bf16 %v553, %v552
  %v604 = vpack.c.bf16 %v555, %v554
  %v605 = vpack.c.bf16 %v557, %v556
  %v606 = vpack.c.bf16 %v559, %v558
  %v607 = vpack.c.bf16 %v561, %v560
  %v608 = vpack.c.bf16 %v563, %v562
  %v609 = vpack.c.bf16 %v565, %v564
  %v610 = vpack.c.bf16 %v567, %v566
  %v611 = vpack.c.bf16 %v569, %v568
  %v612 = vpack.c.bf16 %v571, %v570
  %v613 = vpack.c.bf16 %v573, %v572
  %v614 = vpack.c.bf16 %v575, %v574
  %v615 = vpack.c.bf16 %v577, %v576
  %v616 = vpack.c.bf16 %v579, %v578
  %v617 = vpack.c.bf16 %v581, %v580
  %v618 = vpack.c.bf16 %v583, %v582
  %v619 = vpack.c.bf16 %v585, %v584
  %v620 = vpack.c.bf16 %v587, %v586
  %v621 = vpack.c.bf16 %v589, %v588
  %v622 = vld [vmem:[%s3] sm:$0xf]
  %v623 = vld [vmem:[%s3 + $0x4] sm:$0xf]
  %v624 = vld [vmem:[%s3 + $0x8] sm:$0xf]
  %v625 = vld [vmem:[%s3 + $0xc] sm:$0xf]
  %v626 = vld [vmem:[%s3 + $0x10] sm:$0xf]
  %v627 = vld [vmem:[%s3 + $0x14] sm:$0xf]
  %v628 = vld [vmem:[%s3 + $0x18] sm:$0xf]
  %v629 = vld [vmem:[%s3 + $0x1c] sm:$0xf]
  %v630 = vld [vmem:[%s3 + $0x20] sm:$0xf]
  %v631 = vld [vmem:[%s3 + $0x24] sm:$0xf]
  %v632 = vld [vmem:[%s3 + $0x28] sm:$0xf]
  %v633 = vld [vmem:[%s3 + $0x2c] sm:$0xf]
  %v634 = vld [vmem:[%s3 + $0x30] sm:$0xf]
  %v635 = vld [vmem:[%s3 + $0x34] sm:$0xf]
  %v636 = vld [vmem:[%s3 + $0x38] sm:$0xf]
  %v637 = vld [vmem:[%s3 + $0x3c] sm:$0xf]
  %v638 = vld [vmem:[%s4] sm:$0x1]
  %v640 = vlaneseq
  %v641 = vshrl.u32 %v640, 7
  %v642 = vsub.s32 0, %v641
  %v643 = vrot.slane %v638, %v642
  %v661 = vunpack.c.l.b16 %v622
  %v662 = vunpack.c.l.b16 %v623
  %v663 = vunpack.c.l.b16 %v624
  %v664 = vunpack.c.l.b16 %v625
  %v665 = vunpack.c.l.b16 %v626
  %v666 = vunpack.c.l.b16 %v627
  %v667 = vunpack.c.l.b16 %v628
  %v668 = vunpack.c.l.b16 %v629
  %v669 = vunpack.c.l.b16 %v630
  %v670 = vunpack.c.l.b16 %v631
  %v671 = vunpack.c.l.b16 %v632
  %v672 = vunpack.c.l.b16 %v633
  %v673 = vunpack.c.l.b16 %v634
  %v674 = vunpack.c.l.b16 %v635
  %v675 = vunpack.c.l.b16 %v636
  %v676 = vunpack.c.l.b16 %v637
  %v677 = vpack.c.b16 %v662, %v661
  %v678 = vpack.c.b16 %v664, %v663
  %v679 = vpack.c.b16 %v666, %v665
  %v680 = vpack.c.b16 %v668, %v667
  %v681 = vpack.c.b16 %v670, %v669
  %v682 = vpack.c.b16 %v672, %v671
  %v683 = vpack.c.b16 %v674, %v673
  %v684 = vpack.c.b16 %v676, %v675
  %693 = vmatprep.subr.bf16.mxu0 0
  %694 = vmatpush1.bf16.msra.mxu0 %v677
  %695 = vmatprep.subr.bf16.mxu0 0
  %696 = vmatpush1.bf16.msra.mxu0 %v678
  %697 = vmatprep.subr.bf16.mxu0 0
  %698 = vmatpush1.bf16.msra.mxu0 %v679
  %699 = vmatprep.subr.bf16.mxu0 0
  %700 = vmatpush1.bf16.msra.mxu0 %v680
  %701 = vmatprep.subr.bf16.mxu0 0
  %702 = vmatpush1.bf16.msra.mxu0 %v681
  %703 = vmatprep.subr.bf16.mxu0 0
  %704 = vmatpush1.bf16.msra.mxu0 %v682
  %705 = vmatprep.subr.bf16.mxu0 0
  %706 = vmatpush1.bf16.msra.mxu0 %v683
  %707 = vmatprep.subr.bf16.mxu0 0
  %708 = vmatpush1.bf16.msra.mxu0 %v684
  %709 = vmatprep.subr.bf16.mxu0 0
  %710 = vmatpush1.bf16.msra.mxu0 0
  %711 = vmatprep.subr.bf16.mxu0 0
  %712 = vmatpush1.bf16.msra.mxu0 0
  %713 = vmatprep.subr.bf16.mxu0 0
  %714 = vmatpush1.bf16.msra.mxu0 0
  %715 = vmatprep.subr.bf16.mxu0 0
  %716 = vmatpush1.bf16.msra.mxu0 0
  %717 = vmatprep.subr.bf16.mxu0 0
  %718 = vmatpush1.bf16.msra.mxu0 0
  %719 = vmatprep.subr.bf16.mxu0 0
  %720 = vmatpush1.bf16.msra.mxu0 0
  %721 = vmatprep.subr.bf16.mxu0 0
  %722 = vmatpush1.bf16.msra.mxu0 0
  %723 = vmatprep.subr.bf16.mxu0 0
  %724 = vmatpush1.bf16.msra.mxu0 0
  %725 = vmatprep.mubr.bf16.mxu0 0
  %726 = vmatmul.mubr.bf16.gmra.mrb[0].mxu0 %v590
  %v727 = vpop.f32.mrb[0].mxu0
  %v728 = vadd.f32 %v643, %v727
  %v729 = vpop.f32.mrb[0].mxu0
  %v730 = vpop.f32.mrb[0].mxu0
  %v731 = vadd.f32 %v643, %v730
  %v732 = vpop.f32.mrb[0].mxu0
  %733 = vmatprep.mubr.bf16.mxu0 0
  %734 = vmatmul.mubr.bf16.gmra.mrb[0].mxu0 %v591
  %v735 = vpop.f32.mrb[0].mxu0
  %v736 = vadd.f32 %v643, %v735
  %v737 = vpop.f32.mrb[0].mxu0
  %v738 = vpop.f32.mrb[0].mxu0
  %v739 = vadd.f32 %v643, %v738
  %v740 = vpop.f32.mrb[0].mxu0
  %741 = vmatprep.mubr.bf16.mxu0 0
  %742 = vmatmul.mubr.bf16.gmra.mrb[0].mxu0 %v592
  %v743 = vpop.f32.mrb[0].mxu0
  %v744 = vadd.f32 %v643, %v743
  %v745 = vpop.f32.mrb[0].mxu0
  %v746 = vpop.f32.mrb[0].mxu0
  %v747 = vadd.f32 %v643, %v746
  %v748 = vpop.f32.mrb[0].mxu0
  %749 = vmatprep.mubr.bf16.mxu0 0
  %750 = vmatmul.mubr.bf16.gmra.mrb[0].mxu0 %v593
  %v751 = vpop.f32.mrb[0].mxu0
  %v752 = vadd.f32 %v643, %v751
  %v753 = vpop.f32.mrb[0].mxu0
  %v754 = vpop.f32.mrb[0].mxu0
  %v755 = vadd.f32 %v643, %v754
  %v756 = vpop.f32.mrb[0].mxu0
  %757 = vmatprep.mubr.bf16.mxu0 0
  %758 = vmatmul.mubr.bf16.gmra.mrb[0].mxu0 %v594
  %v759 = vpop.f32.mrb[0].mxu0
  %v760 = vadd.f32 %v643, %v759
  %v761 = vpop.f32.mrb[0].mxu0
  %v762 = vpop.f32.mrb[0].mxu0
  %v763 = vadd.f32 %v643, %v762
  %v764 = vpop.f32.mrb[0].mxu0
  %765 = vmatprep.mubr.bf16.mxu0 0
  %766 = vmatmul.mubr.bf16.gmra.mrb[0].mxu0 %v595
  %v767 = vpop.f32.mrb[0].mxu0
  %v768 = vadd.f32 %v643, %v767
  %v769 = vpop.f32.mrb[0].mxu0
  %v770 = vpop.f32.mrb[0].mxu0
  %v771 = vadd.f32 %v643, %v770
  %v772 = vpop.f32.mrb[0].mxu0
  %773 = vmatprep.mubr.bf16.mxu0 0
  %774 = vmatmul.mubr.bf16.gmra.mrb[0].mxu0 %v596
  %v775 = vpop.f32.mrb[0].mxu0
  %v776 = vadd.f32 %v643, %v775
  %v777 = vpop.f32.mrb[0].mxu0
  %v778 = vpop.f32.mrb[0].mxu0
  %v779 = vadd.f32 %v643, %v778
  %v780 = vpop.f32.mrb[0].mxu0
  %781 = vmatprep.mubr.bf16.mxu0 0
  %782 = vmatmul.mubr.bf16.gmra.mrb[0].mxu0 %v597
  %v783 = vpop.f32.mrb[0].mxu0
  %v784 = vadd.f32 %v643, %v783
  %v785 = vpop.f32.mrb[0].mxu0
  %v786 = vpop.f32.mrb[0].mxu0
  %v787 = vadd.f32 %v643, %v786
  %v788 = vpop.f32.mrb[0].mxu0
  %789 = vmatprep.mubr.bf16.mxu0 0
  %790 = vmatmul.mubr.bf16.gmra.mrb[0].mxu0 %v598
  %v791 = vpop.f32.mrb[0].mxu0
  %v792 = vadd.f32 %v643, %v791
  %v793 = vpop.f32.mrb[0].mxu0
  %v794 = vpop.f32.mrb[0].mxu0
  %v795 = vadd.f32 %v643, %v794
  %v796 = vpop.f32.mrb[0].mxu0
  %797 = vmatprep.mubr.bf16.mxu0 0
  %798 = vmatmul.mubr.bf16.gmra.mrb[0].mxu0 %v599
  %v799 = vpop.f32.mrb[0].mxu0
  %v800 = vadd.f32 %v643, %v799
  %v801 = vpop.f32.mrb[0].mxu0
  %v802 = vpop.f32.mrb[0].mxu0
  %v803 = vadd.f32 %v643, %v802
  %v804 = vpop.f32.mrb[0].mxu0
  %805 = vmatprep.mubr.bf16.mxu0 0
  %806 = vmatmul.mubr.bf16.gmra.mrb[0].mxu0 %v600
  %v807 = vpop.f32.mrb[0].mxu0
  %v808 = vadd.f32 %v643, %v807
  %v809 = vpop.f32.mrb[0].mxu0
  %v810 = vpop.f32.mrb[0].mxu0
  %v811 = vadd.f32 %v643, %v810
  %v812 = vpop.f32.mrb[0].mxu0
  %813 = vmatprep.mubr.bf16.mxu0 0
  %814 = vmatmul.mubr.bf16.gmra.mrb[0].mxu0 %v601
  %v815 = vpop.f32.mrb[0].mxu0
  %v816 = vadd.f32 %v643, %v815
  %v817 = vpop.f32.mrb[0].mxu0
  %v818 = vpop.f32.mrb[0].mxu0
  %v819 = vadd.f32 %v643, %v818
  %v820 = vpop.f32.mrb[0].mxu0
  %821 = vmatprep.mubr.bf16.mxu0 0
  %822 = vmatmul.mubr.bf16.gmra.mrb[0].mxu0 %v602
  %v823 = vpop.f32.mrb[0].mxu0
  %v824 = vadd.f32 %v643, %v823
  %v825 = vpop.f32.mrb[0].mxu0
  %v826 = vpop.f32.mrb[0].mxu0
  %v827 = vadd.f32 %v643, %v826
  %v828 = vpop.f32.mrb[0].mxu0
  %829 = vmatprep.mubr.bf16.mxu0 0
  %830 = vmatmul.mubr.bf16.gmra.mrb[0].mxu0 %v603
  %v831 = vpop.f32.mrb[0].mxu0
  %v832 = vadd.f32 %v643, %v831
  %v833 = vpop.f32.mrb[0].mxu0
  %v834 = vpop.f32.mrb[0].mxu0
  %v835 = vadd.f32 %v643, %v834
  %v836 = vpop.f32.mrb[0].mxu0
  %837 = vmatprep.mubr.bf16.mxu0 0
  %838 = vmatmul.mubr.bf16.gmra.mrb[0].mxu0 %v604
  %v839 = vpop.f32.mrb[0].mxu0
  %v840 = vadd.f32 %v643, %v839
  %v841 = vpop.f32.mrb[0].mxu0
  %v842 = vpop.f32.mrb[0].mxu0
  %v843 = vadd.f32 %v643, %v842
  %v844 = vpop.f32.mrb[0].mxu0
  %845 = vmatprep.mubr.bf16.mxu0 0
  %846 = vmatmul.mubr.bf16.gmra.mrb[0].mxu0 %v605
  %v847 = vpop.f32.mrb[0].mxu0
  %v848 = vadd.f32 %v643, %v847
  %v849 = vpop.f32.mrb[0].mxu0
  %v850 = vpop.f32.mrb[0].mxu0
  %v851 = vadd.f32 %v643, %v850
  %v852 = vpop.f32.mrb[0].mxu0
  %853 = vmatprep.mubr.bf16.mxu0 0
  %854 = vmatmul.mubr.bf16.gmra.mrb[0].mxu0 %v606
  %v855 = vpop.f32.mrb[0].mxu0
  %v856 = vadd.f32 %v643, %v855
  %v857 = vpop.f32.mrb[0].mxu0
  %v858 = vpop.f32.mrb[0].mxu0
  %v859 = vadd.f32 %v643, %v858
  %v860 = vpop.f32.mrb[0].mxu0
  %861 = vmatprep.mubr.bf16.mxu0 0
  %862 = vmatmul.mubr.bf16.gmra.mrb[0].mxu0 %v607
  %v863 = vpop.f32.mrb[0].mxu0
  %v864 = vadd.f32 %v643, %v863
  %v865 = vpop.f32.mrb[0].mxu0
  %v866 = vpop.f32.mrb[0].mxu0
  %v867 = vadd.f32 %v643, %v866
  %v868 = vpop.f32.mrb[0].mxu0
  %869 = vmatprep.mubr.bf16.mxu0 0
  %870 = vmatmul.mubr.bf16.gmra.mrb[0].mxu0 %v608
  %v871 = vpop.f32.mrb[0].mxu0
  %v872 = vadd.f32 %v643, %v871
  %v873 = vpop.f32.mrb[0].mxu0
  %v874 = vpop.f32.mrb[0].mxu0
  %v875 = vadd.f32 %v643, %v874
  %v876 = vpop.f32.mrb[0].mxu0
  %877 = vmatprep.mubr.bf16.mxu0 0
  %878 = vmatmul.mubr.bf16.gmra.mrb[0].mxu0 %v609
  %v879 = vpop.f32.mrb[0].mxu0
  %v880 = vadd.f32 %v643, %v879
  %v881 = vpop.f32.mrb[0].mxu0
  %v882 = vpop.f32.mrb[0].mxu0
  %v883 = vadd.f32 %v643, %v882
  %v884 = vpop.f32.mrb[0].mxu0
  %885 = vmatprep.mubr.bf16.mxu0 0
  %886 = vmatmul.mubr.bf16.gmra.mrb[0].mxu0 %v610
  %v887 = vpop.f32.mrb[0].mxu0
  %v888 = vadd.f32 %v643, %v887
  %v889 = vpop.f32.mrb[0].mxu0
  %v890 = vpop.f32.mrb[0].mxu0
  %v891 = vadd.f32 %v643, %v890
  %v892 = vpop.f32.mrb[0].mxu0
  %893 = vmatprep.mubr.bf16.mxu0 0
  %894 = vmatmul.mubr.bf16.gmra.mrb[0].mxu0 %v611
  %v895 = vpop.f32.mrb[0].mxu0
  %v896 = vadd.f32 %v643, %v895
  %v897 = vpop.f32.mrb[0].mxu0
  %v898 = vpop.f32.mrb[0].mxu0
  %v899 = vadd.f32 %v643, %v898
  %v900 = vpop.f32.mrb[0].mxu0
  %901 = vmatprep.mubr.bf16.mxu0 0
  %902 = vmatmul.mubr.bf16.gmra.mrb[0].mxu0 %v612
  %v903 = vpop.f32.mrb[0].mxu0
  %v904 = vadd.f32 %v643, %v903
  %v905 = vpop.f32.mrb[0].mxu0
  %v906 = vpop.f32.mrb[0].mxu0
  %v907 = vadd.f32 %v643, %v906
  %v908 = vpop.f32.mrb[0].mxu0
  %909 = vmatprep.mubr.bf16.mxu0 0
  %910 = vmatmul.mubr.bf16.gmra.mrb[0].mxu0 %v613
  %v911 = vpop.f32.mrb[0].mxu0
  %v912 = vadd.f32 %v643, %v911
  %v913 = vpop.f32.mrb[0].mxu0
  %v914 = vpop.f32.mrb[0].mxu0
  %v915 = vadd.f32 %v643, %v914
  %v916 = vpop.f32.mrb[0].mxu0
  %917 = vmatprep.mubr.bf16.mxu0 0
  %918 = vmatmul.mubr.bf16.gmra.mrb[0].mxu0 %v614
  %v919 = vpop.f32.mrb[0].mxu0
  %v920 = vadd.f32 %v643, %v919
  %v921 = vpop.f32.mrb[0].mxu0
  %v922 = vpop.f32.mrb[0].mxu0
  %v923 = vadd.f32 %v643, %v922
  %v924 = vpop.f32.mrb[0].mxu0
  %925 = vmatprep.mubr.bf16.mxu0 0
  %926 = vmatmul.mubr.bf16.gmra.mrb[0].mxu0 %v615
  %v927 = vpop.f32.mrb[0].mxu0
  %v928 = vadd.f32 %v643, %v927
  %v929 = vpop.f32.mrb[0].mxu0
  %v930 = vpop.f32.mrb[0].mxu0
  %v931 = vadd.f32 %v643, %v930
  %v932 = vpop.f32.mrb[0].mxu0
  %933 = vmatprep.mubr.bf16.mxu0 0
  %934 = vmatmul.mubr.bf16.gmra.mrb[0].mxu0 %v616
  %v935 = vpop.f32.mrb[0].mxu0
  %v936 = vadd.f32 %v643, %v935
  %v937 = vpop.f32.mrb[0].mxu0
  %v938 = vpop.f32.mrb[0].mxu0
  %v939 = vadd.f32 %v643, %v938
  %v940 = vpop.f32.mrb[0].mxu0
  %941 = vmatprep.mubr.bf16.mxu0 0
  %942 = vmatmul.mubr.bf16.gmra.mrb[0].mxu0 %v617
  %v943 = vpop.f32.mrb[0].mxu0
  %v944 = vadd.f32 %v643, %v943
  %v945 = vpop.f32.mrb[0].mxu0
  %v946 = vpop.f32.mrb[0].mxu0
  %v947 = vadd.f32 %v643, %v946
  %v948 = vpop.f32.mrb[0].mxu0
  %949 = vmatprep.mubr.bf16.mxu0 0
  %950 = vmatmul.mubr.bf16.gmra.mrb[0].mxu0 %v618
  %v951 = vpop.f32.mrb[0].mxu0
  %v952 = vadd.f32 %v643, %v951
  %v953 = vpop.f32.mrb[0].mxu0
  %v954 = vpop.f32.mrb[0].mxu0
  %v955 = vadd.f32 %v643, %v954
  %v956 = vpop.f32.mrb[0].mxu0
  %957 = vmatprep.mubr.bf16.mxu0 0
  %958 = vmatmul.mubr.bf16.gmra.mrb[0].mxu0 %v619
  %v959 = vpop.f32.mrb[0].mxu0
  %v960 = vadd.f32 %v643, %v959
  %v961 = vpop.f32.mrb[0].mxu0
  %v962 = vpop.f32.mrb[0].mxu0
  %v963 = vadd.f32 %v643, %v962
  %v964 = vpop.f32.mrb[0].mxu0
  %965 = vmatprep.mubr.bf16.mxu0 0
  %966 = vmatmul.mubr.bf16.gmra.mrb[0].mxu0 %v620
  %v967 = vpop.f32.mrb[0].mxu0
  %v968 = vadd.f32 %v643, %v967
  %v969 = vpop.f32.mrb[0].mxu0
  %v970 = vpop.f32.mrb[0].mxu0
  %v971 = vadd.f32 %v643, %v970
  %v972 = vpop.f32.mrb[0].mxu0
  %973 = vmatprep.mubr.bf16.mxu0 0
  %974 = vmatmul.mubr.bf16.gmra.mrb[0].mxu0 %v621
  %v975 = vpop.f32.mrb[0].mxu0
  %v976 = vadd.f32 %v643, %v975
  %v977 = vpop.f32.mrb[0].mxu0
  %v978 = vpop.f32.mrb[0].mxu0
  %v979 = vadd.f32 %v643, %v978
  %v980 = vpop.f32.mrb[0].mxu0
  %981 = vdwg.mxu0
  %982 = vst.msk [vmem:[%s5] sm:$0xff] %vm140, %v728
  %983 = vst.msk [vmem:[%s5 + $0x8] sm:$0xff] %vm140, %v731
  %984 = vst.msk [vmem:[%s5 + $0x10] sm:$0xff] %vm140, %v736
  %985 = vst.msk [vmem:[%s5 + $0x18] sm:$0xff] %vm140, %v739
  %986 = vst.msk [vmem:[%s5 + $0x20] sm:$0xff] %vm140, %v744
  %987 = vst.msk [vmem:[%s5 + $0x28] sm:$0xff] %vm140, %v747
  %988 = vst.msk [vmem:[%s5 + $0x30] sm:$0xff] %vm140, %v752
  %989 = vst.msk [vmem:[%s5 + $0x38] sm:$0xff] %vm140, %v755
  %990 = vst.msk [vmem:[%s5 + $0x40] sm:$0xff] %vm140, %v760
  %991 = vst.msk [vmem:[%s5 + $0x48] sm:$0xff] %vm140, %v763
  %992 = vst.msk [vmem:[%s5 + $0x50] sm:$0xff] %vm140, %v768
  %993 = vst.msk [vmem:[%s5 + $0x58] sm:$0xff] %vm140, %v771
  %994 = vst.msk [vmem:[%s5 + $0x60] sm:$0xff] %vm140, %v776
  %995 = vst.msk [vmem:[%s5 + $0x68] sm:$0xff] %vm140, %v779
  %996 = vst.msk [vmem:[%s5 + $0x70] sm:$0xff] %vm140, %v784
  %997 = vst.msk [vmem:[%s5 + $0x78] sm:$0xff] %vm140, %v787
  %998 = vst.msk [vmem:[%s5 + $0x80] sm:$0xff] %vm140, %v792
  %999 = vst.msk [vmem:[%s5 + $0x88] sm:$0xff] %vm140, %v795
  %1000 = vst.msk [vmem:[%s5 + $0x90] sm:$0xff] %vm140, %v800
  %1001 = vst.msk [vmem:[%s5 + $0x98] sm:$0xff] %vm140, %v803
  %1002 = vst.msk [vmem:[%s5 + $0xa0] sm:$0xff] %vm140, %v808
  %1003 = vst.msk [vmem:[%s5 + $0xa8] sm:$0xff] %vm140, %v811
  %1004 = vst.msk [vmem:[%s5 + $0xb0] sm:$0xff] %vm140, %v816
  %1005 = vst.msk [vmem:[%s5 + $0xb8] sm:$0xff] %vm140, %v819
  %1006 = vst.msk [vmem:[%s5 + $0xc0] sm:$0xff] %vm140, %v824
  %1007 = vst.msk [vmem:[%s5 + $0xc8] sm:$0xff] %vm140, %v827
  %1008 = vst.msk [vmem:[%s5 + $0xd0] sm:$0xff] %vm140, %v832
  %1009 = vst.msk [vmem:[%s5 + $0xd8] sm:$0xff] %vm140, %v835
  %1010 = vst.msk [vmem:[%s5 + $0xe0] sm:$0xff] %vm140, %v840
  %1011 = vst.msk [vmem:[%s5 + $0xe8] sm:$0xff] %vm140, %v843
  %1012 = vst.msk [vmem:[%s5 + $0xf0] sm:$0xff] %vm140, %v848
  %1013 = vst.msk [vmem:[%s5 + $0xf8] sm:$0xff] %vm140, %v851
  %1014 = vst.msk [vmem:[%s5 + $0x100] sm:$0xff] %vm140, %v856
  %1015 = vst.msk [vmem:[%s5 + $0x108] sm:$0xff] %vm140, %v859
  %1016 = vst.msk [vmem:[%s5 + $0x110] sm:$0xff] %vm140, %v864
  %1017 = vst.msk [vmem:[%s5 + $0x118] sm:$0xff] %vm140, %v867
  %1018 = vst.msk [vmem:[%s5 + $0x120] sm:$0xff] %vm140, %v872
  %1019 = vst.msk [vmem:[%s5 + $0x128] sm:$0xff] %vm140, %v875
  %1020 = vst.msk [vmem:[%s5 + $0x130] sm:$0xff] %vm140, %v880
  %1021 = vst.msk [vmem:[%s5 + $0x138] sm:$0xff] %vm140, %v883
  %1022 = vst.msk [vmem:[%s5 + $0x140] sm:$0xff] %vm140, %v888
  %1023 = vst.msk [vmem:[%s5 + $0x148] sm:$0xff] %vm140, %v891
  %1024 = vst.msk [vmem:[%s5 + $0x150] sm:$0xff] %vm140, %v896
  %1025 = vst.msk [vmem:[%s5 + $0x158] sm:$0xff] %vm140, %v899
  %1026 = vst.msk [vmem:[%s5 + $0x160] sm:$0xff] %vm140, %v904
  %1027 = vst.msk [vmem:[%s5 + $0x168] sm:$0xff] %vm140, %v907
  %1028 = vst.msk [vmem:[%s5 + $0x170] sm:$0xff] %vm140, %v912
  %1029 = vst.msk [vmem:[%s5 + $0x178] sm:$0xff] %vm140, %v915
  %1030 = vst.msk [vmem:[%s5 + $0x180] sm:$0xff] %vm140, %v920
  %1031 = vst.msk [vmem:[%s5 + $0x188] sm:$0xff] %vm140, %v923
  %1032 = vst.msk [vmem:[%s5 + $0x190] sm:$0xff] %vm140, %v928
  %1033 = vst.msk [vmem:[%s5 + $0x198] sm:$0xff] %vm140, %v931
  %1034 = vst.msk [vmem:[%s5 + $0x1a0] sm:$0xff] %vm140, %v936
  %1035 = vst.msk [vmem:[%s5 + $0x1a8] sm:$0xff] %vm140, %v939
  %1036 = vst.msk [vmem:[%s5 + $0x1b0] sm:$0xff] %vm140, %v944
  %1037 = vst.msk [vmem:[%s5 + $0x1b8] sm:$0xff] %vm140, %v947
  %1038 = vst.msk [vmem:[%s5 + $0x1c0] sm:$0xff] %vm140, %v952
  %1039 = vst.msk [vmem:[%s5 + $0x1c8] sm:$0xff] %vm140, %v955
  %1040 = vst.msk [vmem:[%s5 + $0x1d0] sm:$0xff] %vm140, %v960
  %1041 = vst.msk [vmem:[%s5 + $0x1d8] sm:$0xff] %vm140, %v963
  %1042 = vst.msk [vmem:[%s5 + $0x1e0] sm:$0xff] %vm140, %v968
  %1043 = vst.msk [vmem:[%s5 + $0x1e8] sm:$0xff] %vm140, %v971
  %1044 = vst.msk [vmem:[%s5 + $0x1f0] sm:$0xff] %vm140, %v976
  %1045 = vst.msk [vmem:[%s5 + $0x1f8] sm:$0xff] %vm140, %v979
  // Predicated region
  $region22: #{tpu_custom_call.1} parent=0 // pred_check
    _
  $region23: #{tpu_custom_call.1} parent=0 // pred_check_branch
    %1047 = sbr.rel (0) target = $region25
  $region24: #{tpu_custom_call.1} parent=0 // pred_region
    _
  $region25: #{tpu_custom_call.1} parent=0 // pred_fallthru
    _
  // Predicated region
  $region26: #{tpu_custom_call.1} parent=0 // pred_check
    _
  $region27: #{tpu_custom_call.1} parent=0 // pred_check_branch
    %1049 = sbr.rel (0) target = $region29
  $region28: #{tpu_custom_call.1} parent=0 // pred_region
    _
  $region29: #{tpu_custom_call.1} parent=0 // pred_fallthru
    _

</llo_original>
